<compile_context>
chip_gen: v6e
topology: v6e:2x2x1
jax: 0.10.0
libtpu: 0.0.40
codegen_flags: <defaults>
</compile_context>

<pallas_src>
import jax
import jax.numpy as jnp
from jax.experimental import pallas as pl
from jax.experimental.pallas import tpu as pltpu


def _round_up(x, m):
    return (x + m - 1) // m * m


# ----------------------------------------------------------------------------
# Kernel: one batch-tiled GEMM + bias epilogue.
# x: [TB, H], w: [H, N], b: [1, N]  ->  out: [TB, N]   (f32 accumulation)
# ----------------------------------------------------------------------------
def _linear_bias_kernel(x_ref, w_ref, b_ref, out_ref):
    acc = jnp.dot(x_ref[...], w_ref[...], preferred_element_type=jnp.float32)
    acc = acc + b_ref[...].astype(jnp.float32)
    out_ref[...] = acc.astype(out_ref.dtype)


def _pick_tile_b(B, H, N, block_b):
    """Pick the batch tile: multiple of 8, VMEM-checked, >=2 steps if possible."""
    TB = min(block_b, _round_up(B, 8))
    TB = max(8, _round_up(TB, 8))

    # Megacore (v7x): make sure the "parallel" batch axis has >= 2 grid steps
    # so the second TensorCore is not idle.
    if pl.cdiv(B, TB) < 2 and B > 8:
        TB = _round_up(pl.cdiv(B, 2), 8)

    # Conservative VMEM budget (f32): x double-buffer + weights (counted as
    # double-buffered) + bias + output double-buffer.  Keep under ~40 MiB so
    # it fits v7x's 64 MiB physical / per-TC VMEM with headroom (v5e/v6e have
    # 128 MiB, so this is never the binding constraint there).
    def vmem_bytes(tb):
        return 4 * (2 * tb * H + 2 * H * N + 2 * N + 2 * tb * N)

    budget = 40 * 1024 * 1024
    while TB > 8 and vmem_bytes(TB) > budget:
        TB = max(8, _round_up(TB // 2, 8))
    return TB, vmem_bytes(TB)


def _fused_linear(x, w, b, out_dtype, *, block_b=512):
    """out = x @ w + b via a batch-tiled Pallas GEMM (no wrapper-side copies)."""
    B, H = x.shape
    N = w.shape[1]
    b_row = b.reshape(1, N)

    TB, vmem_need = _pick_tile_b(B, H, N, block_b)
    grid = (pl.cdiv(B, TB),)  # ragged last block handled by Pallas

    cp_kwargs = {}
    if vmem_need > 30 * 1024 * 1024:
        # Raise the scoped-VMEM limit only when the default would not fit;
        # cap at 48 MiB so it is still legal on v7x (64 MiB physical).
        cp_kwargs["vmem_limit_bytes"] = min(
            48 * 1024 * 1024, vmem_need + 2 * 1024 * 1024)

    return pl.pallas_call(
        _linear_bias_kernel,
        out_shape=jax.ShapeDtypeStruct((B, N), out_dtype),
        grid_spec=pltpu.PrefetchScalarGridSpec(
            num_scalar_prefetch=0,
            grid=grid,
            in_specs=[
                pl.BlockSpec((TB, H), lambda i: (i, 0)),   # x tile (pipelined)
                pl.BlockSpec((H, N), lambda i: (0, 0)),    # weights (resident)
                pl.BlockSpec((1, N), lambda i: (0, 0)),    # bias row (resident)
            ],
            out_specs=pl.BlockSpec((TB, N), lambda i: (i, 0)),
        ),
        compiler_params=pltpu.CompilerParams(
            dimension_semantics=("parallel",), **cp_kwargs),
    )(x, w, b_row)


# ----------------------------------------------------------------------------
# Dueling head wrappers
# ----------------------------------------------------------------------------
def fuse_dueling_params(wv, bv, wa, ba):
    """Fold the dueling combine into one linear layer (exact by linearity).

    Call once when weights are static (inference / target network) and pass
    the result to dueling_forward_fused() to avoid per-call folding ops.
    """
    A = wa.shape[1]
    w_fused = wa - jnp.mean(wa, axis=1, keepdims=True) + wv            # [H, A]
    b_fused = (ba.reshape(1, A)
               - jnp.mean(ba.reshape(1, A), axis=1, keepdims=True)
               + bv.reshape(1, 1))                                      # [1, A]
    return w_fused, b_fused


def dueling_forward_fused(x, w_fused, b_fused, *, block_b=512):
    """Dueling forward from pre-fused weights (hot path for inference)."""
    return _fused_linear(x, w_fused, b_fused, x.dtype, block_b=block_b)


def dueling_forward(x, wv, bv, wa, ba, advantages_only=False, *, block_b=512):
    """x: [B, H]; wv: [H, 1]; bv: [1, 1]; wa: [H, A]; ba: [1, A] -> [B, A]."""
    if advantages_only:
        return _fused_linear(x, wa, ba, x.dtype, block_b=block_b)
    w_fused, b_fused = fuse_dueling_params(wv, bv, wa, ba)
    return _fused_linear(x, w_fused, b_fused, x.dtype, block_b=block_b)


def _reference(x, wv, bv, wa, ba):
    adv = x @ wa + ba
    val = x @ wv + bv
    return val + (adv - jnp.mean(adv, axis=1, keepdims=True))


if __name__ == "__main__":
    key = jax.random.PRNGKey(0)
    B, H, A = 8, 32, 8   # batch, hidden features, num actions

    kx, kwv, kbv, kwa, kba = jax.random.split(key, 5)
    bound = 1.0 / jnp.sqrt(H)
    x  = jax.random.normal(kx, (B, H), dtype=jnp.float32)
    wv = jax.random.uniform(kwv, (H, 1), minval=-bound, maxval=bound, dtype=jnp.float32)
    bv = jax.random.uniform(kbv, (1, 1), minval=-bound, maxval=bound, dtype=jnp.float32)
    wa = jax.random.uniform(kwa, (H, A), minval=-bound, maxval=bound, dtype=jnp.float32)
    ba = jax.random.uniform(kba, (1, A), minval=-bound, maxval=bound, dtype=jnp.float32)

    out = dueling_forward(x, wv, bv, wa, ba)
    jax.block_until_ready(out)

    ref = _reference(x, wv, bv, wa, ba)
    assert out.shape == (B, A)
    assert jnp.allclose(out, ref, atol=2e-5, rtol=2e-5)

    # advantages_only path
    adv_only = dueling_forward(x, wv, bv, wa, ba, advantages_only=True)
    jax.block_until_ready(adv_only)
    assert jnp.allclose(adv_only, x @ wa + ba, atol=2e-5, rtol=2e-5)

    # Pre-fused (hoisted) weights path
    wf, bf = fuse_dueling_params(wv, bv, wa, ba)
    out_f = dueling_forward_fused(x, wf, bf)
    jax.block_until_ready(out_f)
    assert jnp.allclose(out_f, ref, atol=2e-5, rtol=2e-5)

    # Non-tile-aligned batch: exercises the ragged last grid block (no pad copy)
    # and the >=2-grid-steps tile shrink.
    xb = jax.random.normal(kx, (13, H), dtype=jnp.float32)
    out_b = dueling_forward(xb, wv, bv, wa, ba)
    jax.block_until_ready(out_b)
    assert out_b.shape == (13, A)
    assert jnp.allclose(out_b, _reference(xb, wv, bv, wa, ba), atol=2e-5, rtol=2e-5)

    print("KERNEL_OK")
</pallas_src>

<mosaic_0001>
module attributes {stable_mosaic.version = 11 : i64} {
  func.func @_linear_bias_kernel(%arg0: i32, %arg1: memref<8x32xf32, #tpu.memory_space<vmem>>, %arg2: memref<32x8xf32, #tpu.memory_space<vmem>>, %arg3: memref<1x8xf32, #tpu.memory_space<vmem>>, %arg4: memref<8x8xf32, #tpu.memory_space<vmem>>) attributes {dimension_semantics = [#tpu.dimension_semantics<parallel>], iteration_bounds = array<i64: 1>, scalar_prefetch = 0 : i64, scratch_operands = 0 : i64, tpu.core_type = #tpu.core_type<tc>, window_params = [{transform_indices = @transform_0, window_bounds = array<i64: 8, 32>}, {pipeline_mode = #tpu.pipeline_mode<synchronous>, transform_indices = @transform_1, window_bounds = array<i64: 32, 8>}, {pipeline_mode = #tpu.pipeline_mode<synchronous>, transform_indices = @transform_2, window_bounds = array<i64: 1, 8>}, {transform_indices = @transform_3, window_bounds = array<i64: 8, 8>}]} {
    %c0 = arith.constant 0 : index
    %c0_0 = arith.constant 0 : index
    %0 = vector.load %arg1[%c0, %c0_0] : memref<8x32xf32, #tpu.memory_space<vmem>>, vector<8x32xf32>
    %c0_1 = arith.constant 0 : index
    %c0_2 = arith.constant 0 : index
    %1 = vector.load %arg2[%c0_1, %c0_2] : memref<32x8xf32, #tpu.memory_space<vmem>>, vector<32x8xf32>
    %cst = arith.constant dense<0.000000e+00> : vector<8x8xf32>
    %2 = tpu.matmul %0, %1, %cst {dimension_numbers = #tpu.dot_dimension_numbers<[1], [0], [0], [1], [0, 0, 1, 1], [], []>} : vector<8x32xf32>, vector<32x8xf32>, vector<8x8xf32> -> vector<8x8xf32>
    %c0_3 = arith.constant 0 : index
    %c0_4 = arith.constant 0 : index
    %3 = vector.load %arg3[%c0_3, %c0_4] : memref<1x8xf32, #tpu.memory_space<vmem>>, vector<1x8xf32>
    %4 = vector.broadcast %3 : vector<1x8xf32> to vector<8x8xf32>
    %5 = arith.addf %2, %4 : vector<8x8xf32>
    %c0_5 = arith.constant 0 : index
    %c0_6 = arith.constant 0 : index
    %6 = vector.load %arg4[%c0_5, %c0_6] : memref<8x8xf32, #tpu.memory_space<vmem>>, vector<8x8xf32>
    tpu.vector_store %arg4[%c0_5, %c0_6], %5 {strides = array<i32>} : memref<8x8xf32, #tpu.memory_space<vmem>>, vector<8x8xf32>,
    return
  }
  func.func @transform_0(%arg0: i32) -> (i32, i32) {
    %c0_i32 = arith.constant 0 : i32
    %c0_i32_0 = arith.constant 0 : i32
    return %arg0, %c0_i32 : i32, i32
  }
  func.func @transform_1(%arg0: i32) -> (i32, i32) {
    %c0_i32 = arith.constant 0 : i32
    %c0_i32_0 = arith.constant 0 : i32
    %c0_i32_1 = arith.constant 0 : i32
    return %c0_i32, %c0_i32_0 : i32, i32
  }
  func.func @transform_2(%arg0: i32) -> (i32, i32) {
    %c0_i32 = arith.constant 0 : i32
    %c0_i32_0 = arith.constant 0 : i32
    %c0_i32_1 = arith.constant 0 : i32
    return %c0_i32, %c0_i32_0 : i32, i32
  }
  func.func @transform_3(%arg0: i32) -> (i32, i32) {
    %c0_i32 = arith.constant 0 : i32
    %c0_i32_0 = arith.constant 0 : i32
    return %arg0, %c0_i32 : i32, i32
  }
}

</mosaic_0001>

<llo_original>
// kernel: tpu_custom_call.1
$region0: #{tpu_custom_call.1}
  #allocation0 [shape = 'u32[]', space=smem, size = 0x4, offset = 0x4, fixed_abs, tag = 'smem constant byte address 0x4 - core index']
  #allocation1 [shape = 'u32[144,128]{1,0:T(1,128)}', space=vmem, size = 0x12000, scoped, tag = 'internal scratch']
  %s0 = inlined_call_operand.vmem [shape: f32[8,32], index: 0, kind: input, shape index: {}]
  %s1 = inlined_call_operand.vmem [shape: f32[32,8], index: 1, kind: input, shape index: {}]
  %s2 = inlined_call_operand.vmem [shape: f32[1,8], index: 2, kind: input, shape index: {}]
  %s3 = inlined_call_operand.hbm [shape: f32[8,8], index: 3, kind: output, shape index: {}]
  %s4 = sld [smem:[#allocation0]]
  $region22: #{tpu_custom_call.1} parent=0
    _
  %s6 = ssub.s32 1, %s4
  %s7 = scalar_select 0, %s6, %s4
  $region1: #{tpu_custom_call.1} parent=0
    #allocation2 [shape = 'u8[4096]{0}', space=vmem, size = 0x1000, scoped, tag = 'output window, operand 0, single buffered']
    #allocation3 [shape = 's32[1]{0}', space=sflag, size = 0x4, scoped, tag = 'scoped memory for tpu_custom_call.1']
    %8 = vsyncpa [#allocation3], 0
    // Predicated region
    $region2: #{tpu_custom_call.1} parent=1 // pred_check
      _
    $region3: #{tpu_custom_call.1} parent=1 // pred_check_branch
      %10 = sbr.rel (0) target = $region5
    $region4: #{tpu_custom_call.1} parent=1 // pred_region
      _
    $region5: #{tpu_custom_call.1} parent=1 // pred_fallthru
      _
    // Predicated region
    $region6: #{tpu_custom_call.1} parent=1 // pred_check
      _
    $region7: #{tpu_custom_call.1} parent=1 // pred_check_branch
      %12 = sbr.rel (0) target = $region9
    $region8: #{tpu_custom_call.1} parent=1 // pred_region
      _
    $region9: #{tpu_custom_call.1} parent=1 // pred_fallthru
      _
    // Predicated region
    $region10: #{tpu_custom_call.1} parent=1 // pred_check
      _
    $region11: #{tpu_custom_call.1} parent=1 // pred_check_branch
      %14 = sbr.rel (0) target = $region13
    $region12: #{tpu_custom_call.1} parent=1 // pred_region
      _
    $region13: #{tpu_custom_call.1} parent=1 // pred_fallthru
      _
    %v15 = vld [vmem:[%s0] sm:$0xff]
    %v16 = vld [vmem:[%s1] sm:$0xff]
    %v17 = vld [vmem:[%s1 + $0x8] sm:$0xff]
    %v18 = vld [vmem:[%s1 + $0x10] sm:$0xff]
    %v19 = vld [vmem:[%s1 + $0x18] sm:$0xff]
    %v20 = vld [vmem:[%s2] sm:$0x1]
    %v22 = vlaneseq
    %v23 = vshrl.u32 %v22, 7
    %v24 = vsub.s32 0, %v23
    %v25 = vrot.slane %v20, %v24
    %vm27 = vcmask 261120
    %v29 = vsel %vm27, %v15, 0
    %31 = vmatprep.subr.mxu0 0.0
    %32 = vmatpush1.msra.mxu0 0.0
    %33 = vmatprep.subr.mxu0 0.0
    %34 = vmatpush1.msra.mxu0 0.0
    %35 = vmatprep.subr.mxu0 0.0
    %36 = vmatpush1.msra.mxu0 0.0
    %37 = vmatprep.subr.mxu0 0.0
    %38 = vmatpush1.msra.mxu0 0.0
    %39 = vmatprep.subr.mxu0 0.0
    %40 = vmatpush1.msra.mxu0 0.0
    %41 = vmatprep.subr.mxu0 0.0
    %42 = vmatpush1.msra.mxu0 0.0
    %43 = vmatprep.subr.mxu0 0.0
    %44 = vmatpush1.msra.mxu0 0.0
    %45 = vmatprep.subr.mxu0 0.0
    %46 = vmatpush1.msra.mxu0 0.0
    %47 = vmatprep.subr.mxu0 0.0
    %48 = vmatpush1.msra.mxu0 0.0
    %49 = vmatprep.subr.mxu0 0.0
    %50 = vmatpush1.msra.mxu0 0.0
    %51 = vmatprep.subr.mxu0 0.0
    %52 = vmatpush1.msra.mxu0 0.0
    %53 = vmatprep.subr.mxu0 0.0
    %54 = vmatpush1.msra.mxu0 0.0
    %55 = vmatprep.subr.mxu0 0.0
    %56 = vmatpush1.msra.mxu0 %v19
    %57 = vmatprep.subr.mxu0 0.0
    %58 = vmatpush1.msra.mxu0 %v18
    %59 = vmatprep.subr.mxu0 0.0
    %60 = vmatpush1.msra.mxu0 %v17
    %61 = vmatprep.subr.mxu0 0.0
    %62 = vmatpush1.msra.mxu0 %v16
    %63 = vmatprep.subr.mxu0 0.0
    %64 = vmatpush2.msra.mxu0 0.0
    %65 = vmatprep.subr.mxu0 0.0
    %66 = vmatpush2.msra.mxu0 0.0
    %67 = vmatprep.subr.mxu0 0.0
    %68 = vmatpush2.msra.mxu0 0.0
    %69 = vmatprep.subr.mxu0 0.0
    %70 = vmatpush2.msra.mxu0 0.0
    %71 = vmatprep.subr.mxu0 0.0
    %72 = vmatpush2.msra.mxu0 0.0
    %73 = vmatprep.subr.mxu0 0.0
    %74 = vmatpush2.msra.mxu0 0.0
    %75 = vmatprep.subr.mxu0 0.0
    %76 = vmatpush2.msra.mxu0 0.0
    %77 = vmatprep.subr.mxu0 0.0
    %78 = vmatpush2.msra.mxu0 0.0
    %79 = vmatprep.subr.mxu0 0.0
    %80 = vmatpush2.msra.mxu0 0.0
    %81 = vmatprep.subr.mxu0 0.0
    %82 = vmatpush2.msra.mxu0 0.0
    %83 = vmatprep.subr.mxu0 0.0
    %84 = vmatpush2.msra.mxu0 0.0
    %85 = vmatprep.subr.mxu0 0.0
    %86 = vmatpush2.msra.mxu0 0.0
    %87 = vmatprep.subr.mxu0 0.0
    %88 = vmatpush2.msra.mxu0 0.0
    %89 = vmatprep.subr.mxu0 0.0
    %90 = vmatpush2.msra.mxu0 0.0
    %91 = vmatprep.subr.mxu0 0.0
    %92 = vmatpush2.msra.mxu0 0.0
    %93 = vmatprep.subr.mxu0 0.0
    %94 = vmatpush2.msra.mxu0 0.0
    %95 = vmatprep.mubr.f32.mxu0 0.0
    %96 = vmatmul.mubr.f32.gmra.mxu0 %v29
    %v97 = vpop.f32.mrf.mxu0
    %v98 = vadd.f32 %v25, %v97
    %v99 = vpop.f32.mrf.mxu0
    %100 = vdwg.mxu0
    %vm101 = vcmask 64512
    %102 = vst.msk [vmem:[#allocation2] sm:$0xff] %vm101, %v98
    // Predicated region
    $region14: #{tpu_custom_call.1} parent=1 // pred_check
      _
    $region15: #{tpu_custom_call.1} parent=1 // pred_check_branch
      %104 = sbr.rel (0) target = $region17
    $region16: #{tpu_custom_call.1} parent=1 // pred_region
      %s106 = ssub.s32 128, 128
      %107 = vsyncadd [#allocation3], %s106
      %s109 = sshll.u32 [#allocation2], 4
      %s110 = int_to_ptr.vmem [resolvable:$true] %s109
      %112 = dma.vmem_to_hbm [thread:$0]  %s110, 128, %s3, [#allocation3]
    $region17: #{tpu_custom_call.1} parent=1 // pred_fallthru
      _
    // Predicated region
    $region18: #{tpu_custom_call.1} parent=1 // pred_check
      _
    $region19: #{tpu_custom_call.1} parent=1 // pred_check_branch
      %114 = sbr.rel (0) target = $region21
    $region20: #{tpu_custom_call.1} parent=1 // pred_region
      %115 = dma.done [#allocation3], 128
    $region21: #{tpu_custom_call.1} parent=1 // pred_fallthru
      _
    %116 = vsyncpa [#allocation3], 1

</llo_original>
